<compile_context>
chip_gen: v5e
topology: v5e:2x2
jax: 0.10.0
libtpu: 0.0.40
codegen_flags: <defaults>
</compile_context>

<pallas_src>
import functools

import jax
import jax.numpy as jnp
import numpy as np
from jax.experimental import pallas as pl
from jax.experimental.pallas import tpu as pltpu


def _cell_kernel(s0_ref, s1_ref, x0_ref, w1_ref, w2_ref, bn_ref, out_ref,
                 *, bt, k, d, alpha):
    """Fused kernel: kNN graph + preprocess1 + edgeii op for `bt` point clouds."""
    N = s0_ref.shape[1]
    C0 = s0_ref.shape[2]
    C4 = x0_ref.shape[2]

    bn = bn_ref[...]                      # (4, C4): [sc1; sh1; sc2; sh2]
    sc1 = bn[0:1, :]
    sh1 = bn[1:2, :]
    sc2 = bn[2:3, :]
    sh2 = bn[3:4, :]

    w1 = w1_ref[...]                      # (Cp, C4)
    w2cat = w2_ref[...]                   # (C4, 2*C4) = [w2a | w2b]

    kd = k * d
    # packed-key constants: column index lives in the low log2ceil(N) bits
    lpow = 1
    while lpow < N:
        lpow *= 2
    idx_mask = jnp.int32(lpow - 1)
    clear_mask = jnp.int32(-lpow)                    # == ~(lpow - 1)
    sentinel = jnp.int32(2147483647)                 # > any finite packed key

    # hoisted loop-invariants (iota / small constants)
    col = jax.lax.broadcasted_iota(jnp.int32, (N, N), 1)
    ones_row = jnp.ones((1, C0), jnp.float32)

    def one_cloud(b):
        # ---------------- preprocess1: 1x1 conv -> BN(eval, folded) -> ReLU ----------
        y = jnp.dot(s1_ref[b], w1, preferred_element_type=jnp.float32)   # (N, C4)
        y = jnp.maximum(y * sc1 + sh1, 0.0)

        # ---------------- edgeii loop-invariants, BN2 folded, one fused matmul -------
        # z_m = relu((y@w2a + (x_j - y)@w2b) * sc2 + sh2) = relu(zc + gather_j(yb_s))
        z12 = jnp.dot(y, w2cat, preferred_element_type=jnp.float32)      # (N, 2*C4)
        zi = z12[:, :C4]
        yb = z12[:, C4:]
        yb_s = yb * sc2                               # gathered term, BN scale folded
        zc = (zi - yb) * sc2 + sh2                    # center term, fully folded
        yb_bf = yb_s.astype(jnp.bfloat16)             # bf16 MXU operand (f32 accum)

        # ---------------- dilated kNN graph on s0[b] ---------------------------------
        x = s0_ref[b]                                                    # (N, C0)
        xx = x * x
        gram = jax.lax.dot_general(x, x, (((1,), (1,)), ((), ())),
                                   preferred_element_type=jnp.float32)   # x @ x.T
        sq_i = jnp.sum(xx, axis=-1, keepdims=True)                       # (N, 1)
        sq_j = jax.lax.dot_general(ones_row, xx, (((1,), (1,)), ((), ())),
                                   preferred_element_type=jnp.float32)   # (1, N)
        dist = jnp.maximum(sq_i + sq_j - 2.0 * gram, 0.0)                # >= 0
        # single-reduction argmin key: monotone in dist, ties break to smallest index
        key = (pltpu.bitcast(dist, jnp.int32) & clear_mask) | col        # (N, N) int32

        # serial top-(k*d), gather fused per selected neighbor, running max.
        # max_m relu(zc + g_m) == relu(zc + max_m g_m)  (relu monotone, zc shared)
        gmax = None
        for m in range(kd):                    # short fixed trip count: static unroll
            kmin = jnp.min(key, axis=-1, keepdims=True)                  # (N, 1)
            idx = kmin & idx_mask                                        # argmin col
            if m % d == 0:                     # dilated selection: every d-th neighbor
                onehot = (col == idx).astype(jnp.bfloat16)               # exact in bf16
                g = jnp.dot(onehot, yb_bf, preferred_element_type=jnp.float32)
                gmax = g if gmax is None else jnp.maximum(gmax, g)
            if m + 1 < kd:
                key = jnp.where(col == idx, sentinel, key)

        best = jnp.maximum(zc + gmax, 0.0)
        # GCNII initial residual; single full-block store when bt == 1
        out_ref[b] = (1.0 - alpha) * best + alpha * x0_ref[b]

    if bt == 1:
        one_cloud(0)
    else:
        # fori_loop bounds the live ranges of the per-cloud (N,N) temporaries
        def body(b, carry):
            one_cloud(b)
            return carry
        jax.lax.fori_loop(0, bt, body, 0)


def _pick_block_batch(B, N, target_rows=256):
    """Largest divisor of B with bt*N <= ~target_rows, keeping >=2 grid steps
    when B >= 2 so the parallel batch axis can still be split across TensorCores.
    TODO(synk): on single-TC chips (v5e/v6e) the >=2-step constraint only adds
    ~0.35us/step pipeline overhead; relax it if chip introspection is available."""
    best = 1
    for bt in range(1, B + 1):
        if B % bt == 0 and bt * N <= max(target_rows, N) and (B // bt >= 2 or B == 1):
            best = bt
    return best


def cell_forward(s0, s1, x0, params, *, k=9, d=1, alpha=0.1, bt=None,
                 vmem_limit_bytes=None):
    B, N, C0 = s0.shape
    Cp = s1.shape[-1]
    C4 = x0.shape[-1]
    eps = 1e-5
    assert k * d <= N

    if bt is None:
        bt = _pick_block_batch(B, N)
    assert B % bt == 0

    # Fold eval-mode BatchNorm into per-channel scale/shift, packed into one array.
    inv1 = params["gamma1"] / jnp.sqrt(params["var1"] + eps)
    sc1 = inv1
    sh1 = params["beta1"] - params["mean1"] * inv1
    inv2 = params["gamma2"] / jnp.sqrt(params["var2"] + eps)
    sc2 = inv2
    sh2 = params["beta2"] - params["mean2"] * inv2
    bn = jnp.stack([sc1, sh1, sc2, sh2], axis=0).astype(jnp.float32)   # (4, C4)

    # Fuse the two halves of w2 (rows act on [x_i ; x_j - x_i]) into one operand
    # so the kernel does a single y @ [w2a | w2b] matmul.
    w2 = params["w2"].astype(jnp.float32)                              # (2*C4, C4)
    w2cat = jnp.concatenate([w2[:C4], w2[C4:]], axis=1)                # (C4, 2*C4)

    kernel = functools.partial(_cell_kernel, bt=bt, k=k, d=d, alpha=alpha)

    # Advisory cost hint for XLA scheduling around the custom call.
    flops = B * (2 * N * N * C0                # pairwise gram
                 + 2 * N * Cp * C4             # preprocess 1x1 conv
                 + 2 * N * C4 * (2 * C4)       # fused w2 matmul
                 + 2 * k * N * N * C4)         # per-neighbor one-hot gathers
    bytes_accessed = 4 * (B * N * (C0 + Cp + 2 * C4)
                          + Cp * C4 + C4 * 2 * C4 + 4 * C4)
    cost = pl.CostEstimate(flops=flops, transcendentals=0,
                           bytes_accessed=bytes_accessed)

    # With the (k*N, N) one-hot gone the per-step working set is ~(N,N) key + one-hot
    # + I/O double buffers, which fits the 32 MiB default scoped VMEM on all
    # generations for bt*N <= 256; raise vmem_limit_bytes only if tiles are enlarged.
    compiler_params = pltpu.CompilerParams(
        dimension_semantics=("parallel",),
        vmem_limit_bytes=vmem_limit_bytes)

    return pl.pallas_call(
        kernel,
        out_shape=jax.ShapeDtypeStruct((B, N, C4), jnp.float32),
        grid_spec=pltpu.PrefetchScalarGridSpec(
            num_scalar_prefetch=0,
            grid=(B // bt,),
            in_specs=[
                pl.BlockSpec((bt, N, C0), lambda b: (b, 0, 0)),   # s0
                pl.BlockSpec((bt, N, Cp), lambda b: (b, 0, 0)),   # s1
                pl.BlockSpec((bt, N, C4), lambda b: (b, 0, 0)),   # x_0
                pl.BlockSpec((Cp, C4), lambda b: (0, 0)),         # w1
                pl.BlockSpec((C4, 2 * C4), lambda b: (0, 0)),     # [w2a | w2b]
                pl.BlockSpec((4, C4), lambda b: (0, 0)),          # packed BN scale/shift
            ],
            out_specs=pl.BlockSpec((bt, N, C4), lambda b: (b, 0, 0)),
        ),
        compiler_params=compiler_params,
        cost_estimate=cost,
    )(s0, s1, x0, params["w1"], w2cat, bn)


def reference_forward(s0, s1, x0, params, *, k=9, d=1, alpha=0.1):
    """Pure-JAX reference with identical semantics, for validation."""
    eps = 1e-5
    hp = jax.lax.Precision.HIGHEST
    C4 = x0.shape[-1]

    inv1 = params["gamma1"] / jnp.sqrt(params["var1"] + eps)
    sc1, sh1 = inv1, params["beta1"] - params["mean1"] * inv1
    inv2 = params["gamma2"] / jnp.sqrt(params["var2"] + eps)
    sc2, sh2 = inv2, params["beta2"] - params["mean2"] * inv2

    # kNN graph on s0
    gram = jnp.einsum("bnc,bmc->bnm", s0, s0, precision=hp)
    sq = jnp.sum(s0 * s0, axis=-1)
    dist = sq[:, :, None] + sq[:, None, :] - 2.0 * gram
    _, nn_idx = jax.lax.top_k(-dist, k * d)
    nn_idx = nn_idx[..., ::d][..., :k]                               # (B, N, k)

    # preprocess1
    y = jnp.einsum("bnc,cd->bnd", s1, params["w1"], precision=hp)
    y = jnp.maximum(y * sc1 + sh1, 0.0)

    # edgeii
    x_j = jax.vmap(lambda yb, ib: yb[ib])(y, nn_idx)                 # (B, N, k, 4C)
    zi = jnp.einsum("bnc,cd->bnd", y, params["w2"][:C4], precision=hp)
    zj = jnp.einsum("bnkc,cd->bnkd", x_j - y[:, :, None, :],
                    params["w2"][C4:], precision=hp)
    z = jnp.maximum((zi[:, :, None, :] + zj) * sc2 + sh2, 0.0)
    agg = jnp.max(z, axis=2)
    return (1.0 - alpha) * agg + alpha * x0


if __name__ == "__main__":
    # Small shapes consistent with the module: B=2 point clouds of N=16 points.
    B, N = 2, 16
    C_prev_prev, C_prev, C = 8, 8, 8
    C4 = C * 4                                   # 32
    k, d, alpha = 9, 1, 0.1
    drop_prob = 0.0                              # unused by the reference forward

    key = jax.random.PRNGKey(0)
    keys = jax.random.split(key, 9)

    # Inputs (channels-last; PyTorch shapes would be (B, C, N, 1))
    s0 = jax.random.normal(keys[0], (B, N, C_prev_prev), jnp.float32)
    s1 = jax.random.normal(keys[1], (B, N, C_prev), jnp.float32)
    x_0 = jax.random.normal(keys[2], (B, N, C4), jnp.float32)

    # Deterministic parameter init (shapes from the module __init__)
    params = {
        "w1": jax.random.normal(keys[3], (C_prev, C4), jnp.float32) / np.sqrt(C_prev),
        "gamma1": 1.0 + 0.1 * jax.random.normal(keys[4], (C4,), jnp.float32),
        "beta1": 0.1 * jax.random.normal(keys[5], (C4,), jnp.float32),
        "mean1": jnp.zeros((C4,), jnp.float32),
        "var1": jnp.ones((C4,), jnp.float32),
        "w2": jax.random.normal(keys[6], (2 * C4, C4), jnp.float32) / np.sqrt(2 * C4),
        "gamma2": 1.0 + 0.1 * jax.random.normal(keys[7], (C4,), jnp.float32),
        "beta2": 0.1 * jax.random.normal(keys[8], (C4,), jnp.float32),
        "mean2": jnp.zeros((C4,), jnp.float32),
        "var2": jnp.ones((C4,), jnp.float32),
    }

    h1 = cell_forward(s0, s1, x_0, params, k=k, d=d, alpha=alpha)
    h1 = jax.block_until_ready(h1)

    assert h1.shape == (B, N, C4)
    assert bool(jnp.all(jnp.isfinite(h1)))

    ref = reference_forward(s0, s1, x_0, params, k=k, d=d, alpha=alpha)
    np.testing.assert_allclose(np.asarray(h1), np.asarray(ref), rtol=1e-2, atol=1e-2)

    print("KERNEL_OK")
</pallas_src>

<mosaic_0001>
module attributes {stable_mosaic.version = 11 : i64} {
  func.func @_cell_kernel(%arg0: i32, %arg1: memref<1x16x8xf32, #tpu.memory_space<vmem>>, %arg2: memref<1x16x8xf32, #tpu.memory_space<vmem>>, %arg3: memref<1x16x32xf32, #tpu.memory_space<vmem>>, %arg4: memref<8x32xf32, #tpu.memory_space<vmem>>, %arg5: memref<32x64xf32, #tpu.memory_space<vmem>>, %arg6: memref<4x32xf32, #tpu.memory_space<vmem>>, %arg7: memref<1x16x32xf32, #tpu.memory_space<vmem>>) attributes {dimension_semantics = [#tpu.dimension_semantics<parallel>], iteration_bounds = array<i64: 2>, scalar_prefetch = 0 : i64, scratch_operands = 0 : i64, tpu.core_type = #tpu.core_type<tc>, window_params = [{transform_indices = @transform_0, window_bounds = array<i64: 1, 16, 8>}, {transform_indices = @transform_1, window_bounds = array<i64: 1, 16, 8>}, {transform_indices = @transform_2, window_bounds = array<i64: 1, 16, 32>}, {pipeline_mode = #tpu.pipeline_mode<synchronous>, transform_indices = @transform_3, window_bounds = array<i64: 8, 32>}, {pipeline_mode = #tpu.pipeline_mode<synchronous>, transform_indices = @transform_4, window_bounds = array<i64: 32, 64>}, {pipeline_mode = #tpu.pipeline_mode<synchronous>, transform_indices = @transform_5, window_bounds = array<i64: 4, 32>}, {transform_indices = @transform_6, window_bounds = array<i64: 1, 16, 32>}]} {
    %c0 = arith.constant 0 : index
    %c0_0 = arith.constant 0 : index
    %0 = vector.load %arg6[%c0, %c0_0] : memref<4x32xf32, #tpu.memory_space<vmem>>, vector<4x32xf32>
    %1 = vector.extract_strided_slice %0 {offsets = [0, 0], sizes = [1, 32], strides = [1, 1]} : vector<4x32xf32> to vector<1x32xf32>
    %2 = vector.extract_strided_slice %0 {offsets = [1, 0], sizes = [1, 32], strides = [1, 1]} : vector<4x32xf32> to vector<1x32xf32>
    %3 = vector.extract_strided_slice %0 {offsets = [2, 0], sizes = [1, 32], strides = [1, 1]} : vector<4x32xf32> to vector<1x32xf32>
    %4 = vector.extract_strided_slice %0 {offsets = [3, 0], sizes = [1, 32], strides = [1, 1]} : vector<4x32xf32> to vector<1x32xf32>
    %c0_1 = arith.constant 0 : index
    %c0_2 = arith.constant 0 : index
    %5 = vector.load %arg4[%c0_1, %c0_2] : memref<8x32xf32, #tpu.memory_space<vmem>>, vector<8x32xf32>
    %c0_3 = arith.constant 0 : index
    %c0_4 = arith.constant 0 : index
    %6 = vector.load %arg5[%c0_3, %c0_4] : memref<32x64xf32, #tpu.memory_space<vmem>>, vector<32x64xf32>
    %7 = tpu.iota {dimensions = array<i32: 1>} : vector<16x16xi32>
    %cst = arith.constant 1.000000e+00 : f32
    %8 = vector.broadcast %cst : f32 to vector<1x8xf32>
    %c0_5 = arith.constant 0 : index
    %c0_6 = arith.constant 0 : index
    %c0_7 = arith.constant 0 : index
    %9 = vector.load %arg2[%c0_5, %c0_6, %c0_7] : memref<1x16x8xf32, #tpu.memory_space<vmem>>, vector<1x16x8xf32>
    %10 = vector.shape_cast %9 : vector<1x16x8xf32> to vector<16x8xf32>
    %cst_8 = arith.constant dense<0.000000e+00> : vector<16x32xf32>
    %11 = tpu.matmul %10, %5, %cst_8 {dimension_numbers = #tpu.dot_dimension_numbers<[1], [0], [0], [1], [0, 0, 1, 1], [], []>} : vector<16x8xf32>, vector<8x32xf32>, vector<16x32xf32> -> vector<16x32xf32>
    %12 = vector.broadcast %1 : vector<1x32xf32> to vector<16x32xf32>
    %13 = arith.mulf %11, %12 : vector<16x32xf32>
    %14 = vector.broadcast %2 : vector<1x32xf32> to vector<16x32xf32>
    %15 = arith.addf %13, %14 : vector<16x32xf32>
    %cst_9 = arith.constant 0.000000e+00 : f32
    %16 = vector.broadcast %cst_9 : f32 to vector<16x32xf32>
    %17 = arith.maximumf %15, %16 : vector<16x32xf32>
    %cst_10 = arith.constant dense<0.000000e+00> : vector<16x64xf32>
    %18 = tpu.matmul %17, %6, %cst_10 {dimension_numbers = #tpu.dot_dimension_numbers<[1], [0], [0], [1], [0, 0, 1, 1], [], []>} : vector<16x32xf32>, vector<32x64xf32>, vector<16x64xf32> -> vector<16x64xf32>
    %19 = vector.extract_strided_slice %18 {offsets = [0, 0], sizes = [16, 32], strides = [1, 1]} : vector<16x64xf32> to vector<16x32xf32>
    %20 = vector.extract_strided_slice %18 {offsets = [0, 32], sizes = [16, 32], strides = [1, 1]} : vector<16x64xf32> to vector<16x32xf32>
    %21 = vector.broadcast %3 : vector<1x32xf32> to vector<16x32xf32>
    %22 = arith.mulf %20, %21 : vector<16x32xf32>
    %23 = arith.subf %19, %20 : vector<16x32xf32>
    %24 = vector.broadcast %3 : vector<1x32xf32> to vector<16x32xf32>
    %25 = arith.mulf %23, %24 : vector<16x32xf32>
    %26 = vector.broadcast %4 : vector<1x32xf32> to vector<16x32xf32>
    %27 = arith.addf %25, %26 : vector<16x32xf32>
    %28 = arith.truncf %22 : vector<16x32xf32> to vector<16x32xbf16>
    %c0_11 = arith.constant 0 : index
    %c0_12 = arith.constant 0 : index
    %c0_13 = arith.constant 0 : index
    %29 = vector.load %arg1[%c0_11, %c0_12, %c0_13] : memref<1x16x8xf32, #tpu.memory_space<vmem>>, vector<1x16x8xf32>
    %30 = vector.shape_cast %29 : vector<1x16x8xf32> to vector<16x8xf32>
    %31 = arith.mulf %30, %30 : vector<16x8xf32>
    %cst_14 = arith.constant dense<0.000000e+00> : vector<16x16xf32>
    %32 = tpu.matmul %30, %30, %cst_14 {dimension_numbers = #tpu.dot_dimension_numbers<[1], [1], [0], [0], [0, 0, 1, 0], [], []>} : vector<16x8xf32>, vector<16x8xf32>, vector<16x16xf32> -> vector<16x16xf32>
    %cst_15 = arith.constant dense<0.000000e+00> : vector<16xf32>
    %33 = vector.multi_reduction <add>, %31, %cst_15 [1] : vector<16x8xf32> to vector<16xf32>
    %34 = vector.shape_cast %33 : vector<16xf32> to vector<16x1xf32>
    %cst_16 = arith.constant dense<0.000000e+00> : vector<1x16xf32>
    %35 = tpu.matmul %8, %31, %cst_16 {dimension_numbers = #tpu.dot_dimension_numbers<[1], [1], [0], [0], [0, 0, 1, 0], [], []>} : vector<1x8xf32>, vector<16x8xf32>, vector<1x16xf32> -> vector<1x16xf32>
    %36 = vector.broadcast %34 : vector<16x1xf32> to vector<16x16xf32>
    %37 = vector.broadcast %35 : vector<1x16xf32> to vector<16x16xf32>
    %38 = arith.addf %36, %37 : vector<16x16xf32>
    %cst_17 = arith.constant 2.000000e+00 : f32
    %39 = vector.broadcast %cst_17 : f32 to vector<16x16xf32>
    %40 = arith.mulf %39, %32 : vector<16x16xf32>
    %41 = arith.subf %38, %40 : vector<16x16xf32>
    %cst_18 = arith.constant 0.000000e+00 : f32
    %42 = vector.broadcast %cst_18 : f32 to vector<16x16xf32>
    %43 = arith.maximumf %41, %42 : vector<16x16xf32>
    %44 = tpu.bitcast %43 : vector<16x16xf32> -> vector<16x16xi32>
    %c-16_i32 = arith.constant -16 : i32
    %45 = vector.broadcast %c-16_i32 : i32 to vector<16x16xi32>
    %46 = arith.andi %44, %45 : vector<16x16xi32>
    %47 = arith.ori %46, %7 : vector<16x16xi32>
    %cst_19 = arith.constant dense<2147483647> : vector<16xi32>
    %48 = vector.multi_reduction <minsi>, %47, %cst_19 [1] : vector<16x16xi32> to vector<16xi32>
    %49 = vector.shape_cast %48 : vector<16xi32> to vector<16x1xi32>
    %c15_i32 = arith.constant 15 : i32
    %50 = vector.broadcast %c15_i32 : i32 to vector<16x1xi32>
    %51 = arith.andi %49, %50 : vector<16x1xi32>
    %52 = vector.broadcast %51 : vector<16x1xi32> to vector<16x16xi32>
    %53 = arith.cmpi eq, %7, %52 : vector<16x16xi32>
    %54 = arith.extui %53 : vector<16x16xi1> to vector<16x16xi32>
    %55 = arith.sitofp %54 : vector<16x16xi32> to vector<16x16xf32>
    %56 = arith.truncf %55 : vector<16x16xf32> to vector<16x16xbf16>
    %cst_20 = arith.constant dense<0.000000e+00> : vector<16x32xf32>
    %57 = tpu.matmul %56, %28, %cst_20 {dimension_numbers = #tpu.dot_dimension_numbers<[1], [0], [0], [1], [0, 0, 1, 1], [], []>} : vector<16x16xbf16>, vector<16x32xbf16>, vector<16x32xf32> -> vector<16x32xf32>
    %58 = vector.broadcast %51 : vector<16x1xi32> to vector<16x16xi32>
    %59 = arith.cmpi eq, %7, %58 : vector<16x16xi32>
    %c2147483647_i32 = arith.constant 2147483647 : i32
    %60 = vector.broadcast %c2147483647_i32 : i32 to vector<16x16xi32>
    %61 = arith.select %59, %60, %47 : vector<16x16xi1>, vector<16x16xi32>
    %cst_21 = arith.constant dense<2147483647> : vector<16xi32>
    %62 = vector.multi_reduction <minsi>, %61, %cst_21 [1] : vector<16x16xi32> to vector<16xi32>
    %63 = vector.shape_cast %62 : vector<16xi32> to vector<16x1xi32>
    %c15_i32_22 = arith.constant 15 : i32
    %64 = vector.broadcast %c15_i32_22 : i32 to vector<16x1xi32>
    %65 = arith.andi %63, %64 : vector<16x1xi32>
    %66 = vector.broadcast %65 : vector<16x1xi32> to vector<16x16xi32>
    %67 = arith.cmpi eq, %7, %66 : vector<16x16xi32>
    %68 = arith.extui %67 : vector<16x16xi1> to vector<16x16xi32>
    %69 = arith.sitofp %68 : vector<16x16xi32> to vector<16x16xf32>
    %70 = arith.truncf %69 : vector<16x16xf32> to vector<16x16xbf16>
    %cst_23 = arith.constant dense<0.000000e+00> : vector<16x32xf32>
    %71 = tpu.matmul %70, %28, %cst_23 {dimension_numbers = #tpu.dot_dimension_numbers<[1], [0], [0], [1], [0, 0, 1, 1], [], []>} : vector<16x16xbf16>, vector<16x32xbf16>, vector<16x32xf32> -> vector<16x32xf32>
    %72 = arith.maximumf %57, %71 : vector<16x32xf32>
    %73 = vector.broadcast %65 : vector<16x1xi32> to vector<16x16xi32>
    %74 = arith.cmpi eq, %7, %73 : vector<16x16xi32>
    %c2147483647_i32_24 = arith.constant 2147483647 : i32
    %75 = vector.broadcast %c2147483647_i32_24 : i32 to vector<16x16xi32>
    %76 = arith.select %74, %75, %61 : vector<16x16xi1>, vector<16x16xi32>
    %cst_25 = arith.constant dense<2147483647> : vector<16xi32>
    %77 = vector.multi_reduction <minsi>, %76, %cst_25 [1] : vector<16x16xi32> to vector<16xi32>
    %78 = vector.shape_cast %77 : vector<16xi32> to vector<16x1xi32>
    %c15_i32_26 = arith.constant 15 : i32
    %79 = vector.broadcast %c15_i32_26 : i32 to vector<16x1xi32>
    %80 = arith.andi %78, %79 : vector<16x1xi32>
    %81 = vector.broadcast %80 : vector<16x1xi32> to vector<16x16xi32>
    %82 = arith.cmpi eq, %7, %81 : vector<16x16xi32>
    %83 = arith.extui %82 : vector<16x16xi1> to vector<16x16xi32>
    %84 = arith.sitofp %83 : vector<16x16xi32> to vector<16x16xf32>
    %85 = arith.truncf %84 : vector<16x16xf32> to vector<16x16xbf16>
    %cst_27 = arith.constant dense<0.000000e+00> : vector<16x32xf32>
    %86 = tpu.matmul %85, %28, %cst_27 {dimension_numbers = #tpu.dot_dimension_numbers<[1], [0], [0], [1], [0, 0, 1, 1], [], []>} : vector<16x16xbf16>, vector<16x32xbf16>, vector<16x32xf32> -> vector<16x32xf32>
    %87 = arith.maximumf %72, %86 : vector<16x32xf32>
    %88 = vector.broadcast %80 : vector<16x1xi32> to vector<16x16xi32>
    %89 = arith.cmpi eq, %7, %88 : vector<16x16xi32>
    %c2147483647_i32_28 = arith.constant 2147483647 : i32
    %90 = vector.broadcast %c2147483647_i32_28 : i32 to vector<16x16xi32>
    %91 = arith.select %89, %90, %76 : vector<16x16xi1>, vector<16x16xi32>
    %cst_29 = arith.constant dense<2147483647> : vector<16xi32>
    %92 = vector.multi_reduction <minsi>, %91, %cst_29 [1] : vector<16x16xi32> to vector<16xi32>
    %93 = vector.shape_cast %92 : vector<16xi32> to vector<16x1xi32>
    %c15_i32_30 = arith.constant 15 : i32
    %94 = vector.broadcast %c15_i32_30 : i32 to vector<16x1xi32>
    %95 = arith.andi %93, %94 : vector<16x1xi32>
    %96 = vector.broadcast %95 : vector<16x1xi32> to vector<16x16xi32>
    %97 = arith.cmpi eq, %7, %96 : vector<16x16xi32>
    %98 = arith.extui %97 : vector<16x16xi1> to vector<16x16xi32>
    %99 = arith.sitofp %98 : vector<16x16xi32> to vector<16x16xf32>
    %100 = arith.truncf %99 : vector<16x16xf32> to vector<16x16xbf16>
    %cst_31 = arith.constant dense<0.000000e+00> : vector<16x32xf32>
    %101 = tpu.matmul %100, %28, %cst_31 {dimension_numbers = #tpu.dot_dimension_numbers<[1], [0], [0], [1], [0, 0, 1, 1], [], []>} : vector<16x16xbf16>, vector<16x32xbf16>, vector<16x32xf32> -> vector<16x32xf32>
    %102 = arith.maximumf %87, %101 : vector<16x32xf32>
    %103 = vector.broadcast %95 : vector<16x1xi32> to vector<16x16xi32>
    %104 = arith.cmpi eq, %7, %103 : vector<16x16xi32>
    %c2147483647_i32_32 = arith.constant 2147483647 : i32
    %105 = vector.broadcast %c2147483647_i32_32 : i32 to vector<16x16xi32>
    %106 = arith.select %104, %105, %91 : vector<16x16xi1>, vector<16x16xi32>
    %cst_33 = arith.constant dense<2147483647> : vector<16xi32>
    %107 = vector.multi_reduction <minsi>, %106, %cst_33 [1] : vector<16x16xi32> to vector<16xi32>
    %108 = vector.shape_cast %107 : vector<16xi32> to vector<16x1xi32>
    %c15_i32_34 = arith.constant 15 : i32
    %109 = vector.broadcast %c15_i32_34 : i32 to vector<16x1xi32>
    %110 = arith.andi %108, %109 : vector<16x1xi32>
    %111 = vector.broadcast %110 : vector<16x1xi32> to vector<16x16xi32>
    %112 = arith.cmpi eq, %7, %111 : vector<16x16xi32>
    %113 = arith.extui %112 : vector<16x16xi1> to vector<16x16xi32>
    %114 = arith.sitofp %113 : vector<16x16xi32> to vector<16x16xf32>
    %115 = arith.truncf %114 : vector<16x16xf32> to vector<16x16xbf16>
    %cst_35 = arith.constant dense<0.000000e+00> : vector<16x32xf32>
    %116 = tpu.matmul %115, %28, %cst_35 {dimension_numbers = #tpu.dot_dimension_numbers<[1], [0], [0], [1], [0, 0, 1, 1], [], []>} : vector<16x16xbf16>, vector<16x32xbf16>, vector<16x32xf32> -> vector<16x32xf32>
    %117 = arith.maximumf %102, %116 : vector<16x32xf32>
    %118 = vector.broadcast %110 : vector<16x1xi32> to vector<16x16xi32>
    %119 = arith.cmpi eq, %7, %118 : vector<16x16xi32>
    %c2147483647_i32_36 = arith.constant 2147483647 : i32
    %120 = vector.broadcast %c2147483647_i32_36 : i32 to vector<16x16xi32>
    %121 = arith.select %119, %120, %106 : vector<16x16xi1>, vector<16x16xi32>
    %cst_37 = arith.constant dense<2147483647> : vector<16xi32>
    %122 = vector.multi_reduction <minsi>, %121, %cst_37 [1] : vector<16x16xi32> to vector<16xi32>
    %123 = vector.shape_cast %122 : vector<16xi32> to vector<16x1xi32>
    %c15_i32_38 = arith.constant 15 : i32
    %124 = vector.broadcast %c15_i32_38 : i32 to vector<16x1xi32>
    %125 = arith.andi %123, %124 : vector<16x1xi32>
    %126 = vector.broadcast %125 : vector<16x1xi32> to vector<16x16xi32>
    %127 = arith.cmpi eq, %7, %126 : vector<16x16xi32>
    %128 = arith.extui %127 : vector<16x16xi1> to vector<16x16xi32>
    %129 = arith.sitofp %128 : vector<16x16xi32> to vector<16x16xf32>
    %130 = arith.truncf %129 : vector<16x16xf32> to vector<16x16xbf16>
    %cst_39 = arith.constant dense<0.000000e+00> : vector<16x32xf32>
    %131 = tpu.matmul %130, %28, %cst_39 {dimension_numbers = #tpu.dot_dimension_numbers<[1], [0], [0], [1], [0, 0, 1, 1], [], []>} : vector<16x16xbf16>, vector<16x32xbf16>, vector<16x32xf32> -> vector<16x32xf32>
    %132 = arith.maximumf %117, %131 : vector<16x32xf32>
    %133 = vector.broadcast %125 : vector<16x1xi32> to vector<16x16xi32>
    %134 = arith.cmpi eq, %7, %133 : vector<16x16xi32>
    %c2147483647_i32_40 = arith.constant 2147483647 : i32
    %135 = vector.broadcast %c2147483647_i32_40 : i32 to vector<16x16xi32>
    %136 = arith.select %134, %135, %121 : vector<16x16xi1>, vector<16x16xi32>
    %cst_41 = arith.constant dense<2147483647> : vector<16xi32>
    %137 = vector.multi_reduction <minsi>, %136, %cst_41 [1] : vector<16x16xi32> to vector<16xi32>
    %138 = vector.shape_cast %137 : vector<16xi32> to vector<16x1xi32>
    %c15_i32_42 = arith.constant 15 : i32
    %139 = vector.broadcast %c15_i32_42 : i32 to vector<16x1xi32>
    %140 = arith.andi %138, %139 : vector<16x1xi32>
    %141 = vector.broadcast %140 : vector<16x1xi32> to vector<16x16xi32>
    %142 = arith.cmpi eq, %7, %141 : vector<16x16xi32>
    %143 = arith.extui %142 : vector<16x16xi1> to vector<16x16xi32>
    %144 = arith.sitofp %143 : vector<16x16xi32> to vector<16x16xf32>
    %145 = arith.truncf %144 : vector<16x16xf32> to vector<16x16xbf16>
    %cst_43 = arith.constant dense<0.000000e+00> : vector<16x32xf32>
    %146 = tpu.matmul %145, %28, %cst_43 {dimension_numbers = #tpu.dot_dimension_numbers<[1], [0], [0], [1], [0, 0, 1, 1], [], []>} : vector<16x16xbf16>, vector<16x32xbf16>, vector<16x32xf32> -> vector<16x32xf32>
    %147 = arith.maximumf %132, %146 : vector<16x32xf32>
    %148 = vector.broadcast %140 : vector<16x1xi32> to vector<16x16xi32>
    %149 = arith.cmpi eq, %7, %148 : vector<16x16xi32>
    %c2147483647_i32_44 = arith.constant 2147483647 : i32
    %150 = vector.broadcast %c2147483647_i32_44 : i32 to vector<16x16xi32>
    %151 = arith.select %149, %150, %136 : vector<16x16xi1>, vector<16x16xi32>
    %cst_45 = arith.constant dense<2147483647> : vector<16xi32>
    %152 = vector.multi_reduction <minsi>, %151, %cst_45 [1] : vector<16x16xi32> to vector<16xi32>
    %153 = vector.shape_cast %152 : vector<16xi32> to vector<16x1xi32>
    %c15_i32_46 = arith.constant 15 : i32
    %154 = vector.broadcast %c15_i32_46 : i32 to vector<16x1xi32>
    %155 = arith.andi %153, %154 : vector<16x1xi32>
    %156 = vector.broadcast %155 : vector<16x1xi32> to vector<16x16xi32>
    %157 = arith.cmpi eq, %7, %156 : vector<16x16xi32>
    %158 = arith.extui %157 : vector<16x16xi1> to vector<16x16xi32>
    %159 = arith.sitofp %158 : vector<16x16xi32> to vector<16x16xf32>
    %160 = arith.truncf %159 : vector<16x16xf32> to vector<16x16xbf16>
    %cst_47 = arith.constant dense<0.000000e+00> : vector<16x32xf32>
    %161 = tpu.matmul %160, %28, %cst_47 {dimension_numbers = #tpu.dot_dimension_numbers<[1], [0], [0], [1], [0, 0, 1, 1], [], []>} : vector<16x16xbf16>, vector<16x32xbf16>, vector<16x32xf32> -> vector<16x32xf32>
    %162 = arith.maximumf %147, %161 : vector<16x32xf32>
    %163 = vector.broadcast %155 : vector<16x1xi32> to vector<16x16xi32>
    %164 = arith.cmpi eq, %7, %163 : vector<16x16xi32>
    %c2147483647_i32_48 = arith.constant 2147483647 : i32
    %165 = vector.broadcast %c2147483647_i32_48 : i32 to vector<16x16xi32>
    %166 = arith.select %164, %165, %151 : vector<16x16xi1>, vector<16x16xi32>
    %cst_49 = arith.constant dense<2147483647> : vector<16xi32>
    %167 = vector.multi_reduction <minsi>, %166, %cst_49 [1] : vector<16x16xi32> to vector<16xi32>
    %168 = vector.shape_cast %167 : vector<16xi32> to vector<16x1xi32>
    %c15_i32_50 = arith.constant 15 : i32
    %169 = vector.broadcast %c15_i32_50 : i32 to vector<16x1xi32>
    %170 = arith.andi %168, %169 : vector<16x1xi32>
    %171 = vector.broadcast %170 : vector<16x1xi32> to vector<16x16xi32>
    %172 = arith.cmpi eq, %7, %171 : vector<16x16xi32>
    %173 = arith.extui %172 : vector<16x16xi1> to vector<16x16xi32>
    %174 = arith.sitofp %173 : vector<16x16xi32> to vector<16x16xf32>
    %175 = arith.truncf %174 : vector<16x16xf32> to vector<16x16xbf16>
    %cst_51 = arith.constant dense<0.000000e+00> : vector<16x32xf32>
    %176 = tpu.matmul %175, %28, %cst_51 {dimension_numbers = #tpu.dot_dimension_numbers<[1], [0], [0], [1], [0, 0, 1, 1], [], []>} : vector<16x16xbf16>, vector<16x32xbf16>, vector<16x32xf32> -> vector<16x32xf32>
    %177 = arith.maximumf %162, %176 : vector<16x32xf32>
    %178 = arith.addf %27, %177 : vector<16x32xf32>
    %cst_52 = arith.constant 0.000000e+00 : f32
    %179 = vector.broadcast %cst_52 : f32 to vector<16x32xf32>
    %180 = arith.maximumf %178, %179 : vector<16x32xf32>
    %cst_53 = arith.constant 0.899999976 : f32
    %181 = vector.broadcast %cst_53 : f32 to vector<16x32xf32>
    %182 = arith.mulf %181, %180 : vector<16x32xf32>
    %c0_54 = arith.constant 0 : index
    %c0_55 = arith.constant 0 : index
    %c0_56 = arith.constant 0 : index
    %183 = vector.load %arg3[%c0_54, %c0_55, %c0_56] : memref<1x16x32xf32, #tpu.memory_space<vmem>>, vector<1x16x32xf32>
    %184 = vector.shape_cast %183 : vector<1x16x32xf32> to vector<16x32xf32>
    %cst_57 = arith.constant 1.000000e-01 : f32
    %185 = vector.broadcast %cst_57 : f32 to vector<16x32xf32>
    %186 = arith.mulf %185, %184 : vector<16x32xf32>
    %187 = arith.addf %182, %186 : vector<16x32xf32>
    %c0_58 = arith.constant 0 : index
    %c0_59 = arith.constant 0 : index
    %c0_60 = arith.constant 0 : index
    %188 = vector.load %arg7[%c0_58, %c0_59, %c0_60] : memref<1x16x32xf32, #tpu.memory_space<vmem>>, vector<1x16x32xf32>
    %189 = vector.shape_cast %188 : vector<1x16x32xf32> to vector<16x32xf32>
    %190 = vector.shape_cast %187 : vector<16x32xf32> to vector<1x16x32xf32>
    tpu.vector_store %arg7[%c0_58, %c0_59, %c0_60], %190 {strides = array<i32>} : memref<1x16x32xf32, #tpu.memory_space<vmem>>, vector<1x16x32xf32>,
    return
  }
  func.func @transform_0(%arg0: i32) -> (i32, i32, i32) {
    %c0_i32 = arith.constant 0 : i32
    %c0_i32_0 = arith.constant 0 : i32
    %c0_i32_1 = arith.constant 0 : i32
    return %arg0, %c0_i32, %c0_i32_0 : i32, i32, i32
  }
  func.func @transform_1(%arg0: i32) -> (i32, i32, i32) {
    %c0_i32 = arith.constant 0 : i32
    %c0_i32_0 = arith.constant 0 : i32
    %c0_i32_1 = arith.constant 0 : i32
    return %arg0, %c0_i32, %c0_i32_0 : i32, i32, i32
  }
  func.func @transform_2(%arg0: i32) -> (i32, i32, i32) {
    %c0_i32 = arith.constant 0 : i32
    %c0_i32_0 = arith.constant 0 : i32
    %c0_i32_1 = arith.constant 0 : i32
    return %arg0, %c0_i32, %c0_i32_0 : i32, i32, i32
  }
  func.func @transform_3(%arg0: i32) -> (i32, i32) {
    %c0_i32 = arith.constant 0 : i32
    %c0_i32_0 = arith.constant 0 : i32
    %c0_i32_1 = arith.constant 0 : i32
    return %c0_i32, %c0_i32_0 : i32, i32
  }
  func.func @transform_4(%arg0: i32) -> (i32, i32) {
    %c0_i32 = arith.constant 0 : i32
    %c0_i32_0 = arith.constant 0 : i32
    %c0_i32_1 = arith.constant 0 : i32
    return %c0_i32, %c0_i32_0 : i32, i32
  }
  func.func @transform_5(%arg0: i32) -> (i32, i32) {
    %c0_i32 = arith.constant 0 : i32
    %c0_i32_0 = arith.constant 0 : i32
    %c0_i32_1 = arith.constant 0 : i32
    return %c0_i32, %c0_i32_0 : i32, i32
  }
  func.func @transform_6(%arg0: i32) -> (i32, i32, i32) {
    %c0_i32 = arith.constant 0 : i32
    %c0_i32_0 = arith.constant 0 : i32
    %c0_i32_1 = arith.constant 0 : i32
    return %arg0, %c0_i32, %c0_i32_0 : i32, i32, i32
  }
}

</mosaic_0001>

<llo_original>
// kernel: tpu_custom_call.1
$region0: #{tpu_custom_call.1}
  #allocation0 [shape = 'u32[]', space=smem, size = 0x4, offset = 0x4, fixed_abs, tag = 'smem constant byte address 0x4 - core index']
  #allocation1 [shape = 'u32[72,128]{1,0:T(1,128)}', space=vmem, size = 0x9000, scoped, tag = 'internal scratch']
  %s0 = inlined_call_operand.vmem [shape: f32[2,16,8], index: 0, kind: input, shape index: {}]
  %s1 = inlined_call_operand.vmem [shape: f32[2,16,8], index: 1, kind: input, shape index: {}]
  %s2 = inlined_call_operand.vmem [shape: f32[2,16,32], index: 2, kind: input, shape index: {}]
  %s3 = inlined_call_operand.vmem [shape: f32[8,32], index: 3, kind: input, shape index: {}]
  %s4 = inlined_call_operand.vmem [shape: f32[32,64], index: 4, kind: input, shape index: {}]
  %s5 = inlined_call_operand.vmem [shape: f32[4,32], index: 5, kind: input, shape index: {}]
  %s6 = inlined_call_operand.hbm [shape: f32[2,16,32], index: 6, kind: output, shape index: {}]
  %s7 = sld [smem:[#allocation0]]
  $region57: #{tpu_custom_call.1} parent=0
    _
  %s9 = ssub.s32 1, %s7
  %s10 = scalar_select 0, %s9, %s7
  $region1: #{tpu_custom_call.1} parent=0
    #allocation2 [shape = 'u8[16384]{0}', space=vmem, size = 0x4000, scoped, tag = 'output window, operand 0']
    #allocation3 [shape = 's32[2]{0}', space=sflag, size = 0x8, scoped, tag = 'scoped memory for tpu_custom_call.1']
    %11 = vsyncpa [#allocation3], 0
    %s12 = scalar_lea.sflag [#allocation3], 1
    %13 = vsyncpa %s12, 0
    loop: start=0, step=1, limit=4
    $region2: #{tpu_custom_call.1} parent=1 // loop_pre_header
      _
    $region3: #{tpu_custom_call.1} parent=1 // loop_header
      %s15 = sphi 0, %s19
      %p16 = scmp.ge.s32.totalorder %s15, 4
      %s25 = sphi 0, %s27
      %s28 = sphi 0, %s25
      %s29 = sphi 0, %s28
      %s45 = sphi 0, %s29
      %s51 = sphi 0, %s53
      %s54 = sphi 0, %s51
      %s55 = sphi 0, %s54
      %s71 = sphi 0, %s55
      %s77 = sphi 0, %s79
      %s80 = sphi 0, %s77
      %s81 = sphi 0, %s80
      %s97 = sphi 0, %s81
      %s101 = sphi 0, %s101
      %s103 = sphi 0, %s101
      %s104 = sphi 0, %s103
      %s118 = sphi 0, %s104
      %s122 = sphi 0, %s122
      %s124 = sphi 0, %s122
      %s125 = sphi 0, %s124
      %s139 = sphi 0, %s125
      %s143 = sphi 0, %s143
      %s145 = sphi 0, %s143
      %s146 = sphi 0, %s145
      %s160 = sphi 0, %s146
      %s166 = sphi 0, %s168
      %s169 = sphi 0, %s166
      %s170 = sphi 0, %s169
      %s186 = sphi 0, %s170
    $region4: #{tpu_custom_call.1} parent=1 // loop_header_branch
      %18 = sbr.rel (%p16) target = $region8
    $region5: #{tpu_custom_call.1} parent=1 // loop_body
      %s20 = ssub.s32 %s15, 1
      %s21 = ssub.s32 %s15, 2
      %s22 = sadd.s32 %s15, 1
      %s23 = ssub.s32 %s15, %s22
      %p24 = scmp.eq.s32.totalorder %s23, 0
      %s26 = sadd.s32 %s25, 1
      %s27 = scalar_select %p24, %s25, %s26
      %p30 = pneg %p24
      %p31 = scmp.eq.s32.totalorder %s15, 1
      %p32 = por %p30, %p31
      %p33 = scmp.ne.s32.totalorder %s25, %s28
      %p34 = scmp.eq.s32.totalorder %s15, 0
      %p35 = por %p33, %p34
      %p36 = scmp.ne.s32.totalorder %s25, %s28
      %p37 = scmp.eq.s32.totalorder %s20, 1
      %p38 = por %p36, %p37
      %p39 = scmp.ne.s32.totalorder %s28, %s29
      %p40 = scmp.eq.s32.totalorder %s20, 0
      %p41 = por %p39, %p40
      %p42 = scmp.ne.s32.totalorder %s28, %s29
      %p43 = scmp.eq.s32.totalorder %s21, 1
      %p44 = por %p42, %p43
      %p46 = scmp.ne.s32.totalorder %s29, %s45
      %p47 = scmp.eq.s32.totalorder %s21, 0
      %p48 = por %p46, %p47
      %s49 = ssub.s32 %s15, %s22
      %p50 = scmp.eq.s32.totalorder %s49, 0
      %s52 = sadd.s32 %s51, 1
      %s53 = scalar_select %p50, %s51, %s52
      %p56 = pneg %p50
      %p57 = scmp.eq.s32.totalorder %s15, 1
      %p58 = por %p56, %p57
      %p59 = scmp.ne.s32.totalorder %s51, %s54
      %p60 = scmp.eq.s32.totalorder %s15, 0
      %p61 = por %p59, %p60
      %p62 = scmp.ne.s32.totalorder %s51, %s54
      %p63 = scmp.eq.s32.totalorder %s20, 1
      %p64 = por %p62, %p63
      %p65 = scmp.ne.s32.totalorder %s54, %s55
      %p66 = scmp.eq.s32.totalorder %s20, 0
      %p67 = por %p65, %p66
      %p68 = scmp.ne.s32.totalorder %s54, %s55
      %p69 = scmp.eq.s32.totalorder %s21, 1
      %p70 = por %p68, %p69
      %p72 = scmp.ne.s32.totalorder %s55, %s71
      %p73 = scmp.eq.s32.totalorder %s21, 0
      %p74 = por %p72, %p73
      %s75 = ssub.s32 %s15, %s22
      %p76 = scmp.eq.s32.totalorder %s75, 0
      %s78 = sadd.s32 %s77, 1
      %s79 = scalar_select %p76, %s77, %s78
      %p82 = pneg %p76
      %p83 = scmp.eq.s32.totalorder %s15, 1
      %p84 = por %p82, %p83
      %p85 = scmp.ne.s32.totalorder %s77, %s80
      %p86 = scmp.eq.s32.totalorder %s15, 0
      %p87 = por %p85, %p86
      %p88 = scmp.ne.s32.totalorder %s77, %s80
      %p89 = scmp.eq.s32.totalorder %s20, 1
      %p90 = por %p88, %p89
      %p91 = scmp.ne.s32.totalorder %s80, %s81
      %p92 = scmp.eq.s32.totalorder %s20, 0
      %p93 = por %p91, %p92
      %p94 = scmp.ne.s32.totalorder %s80, %s81
      %p95 = scmp.eq.s32.totalorder %s21, 1
      %p96 = por %p94, %p95
      %p98 = scmp.ne.s32.totalorder %s81, %s97
      %p99 = scmp.eq.s32.totalorder %s21, 0
      %p100 = por %p98, %p99
      %s102 = sadd.s32 %s101, 1
      %p105 = scmp.eq.s32.totalorder %s15, 1
      %p106 = scmp.ne.s32.totalorder %s101, %s103
      %p107 = scmp.eq.s32.totalorder %s15, 0
      %p108 = por %p106, %p107
      %p109 = scmp.ne.s32.totalorder %s101, %s103
      %p110 = scmp.eq.s32.totalorder %s20, 1
      %p111 = por %p109, %p110
      %p112 = scmp.ne.s32.totalorder %s103, %s104
      %p113 = scmp.eq.s32.totalorder %s20, 0
      %p114 = por %p112, %p113
      %p115 = scmp.ne.s32.totalorder %s103, %s104
      %p116 = scmp.eq.s32.totalorder %s21, 1
      %p117 = por %p115, %p116
      %p119 = scmp.ne.s32.totalorder %s104, %s118
      %p120 = scmp.eq.s32.totalorder %s21, 0
      %p121 = por %p119, %p120
      %s123 = sadd.s32 %s122, 1
      %p126 = scmp.eq.s32.totalorder %s15, 1
      %p127 = scmp.ne.s32.totalorder %s122, %s124
      %p128 = scmp.eq.s32.totalorder %s15, 0
      %p129 = por %p127, %p128
      %p130 = scmp.ne.s32.totalorder %s122, %s124
      %p131 = scmp.eq.s32.totalorder %s20, 1
      %p132 = por %p130, %p131
      %p133 = scmp.ne.s32.totalorder %s124, %s125
      %p134 = scmp.eq.s32.totalorder %s20, 0
      %p135 = por %p133, %p134
      %p136 = scmp.ne.s32.totalorder %s124, %s125
      %p137 = scmp.eq.s32.totalorder %s21, 1
      %p138 = por %p136, %p137
      %p140 = scmp.ne.s32.totalorder %s125, %s139
      %p141 = scmp.eq.s32.totalorder %s21, 0
      %p142 = por %p140, %p141
      %s144 = sadd.s32 %s143, 1
      %p147 = scmp.eq.s32.totalorder %s15, 1
      %p148 = scmp.ne.s32.totalorder %s143, %s145
      %p149 = scmp.eq.s32.totalorder %s15, 0
      %p150 = por %p148, %p149
      %p151 = scmp.ne.s32.totalorder %s143, %s145
      %p152 = scmp.eq.s32.totalorder %s20, 1
      %p153 = por %p151, %p152
      %p154 = scmp.ne.s32.totalorder %s145, %s146
      %p155 = scmp.eq.s32.totalorder %s20, 0
      %p156 = por %p154, %p155
      %p157 = scmp.ne.s32.totalorder %s145, %s146
      %p158 = scmp.eq.s32.totalorder %s21, 1
      %p159 = por %p157, %p158
      %p161 = scmp.ne.s32.totalorder %s146, %s160
      %p162 = scmp.eq.s32.totalorder %s21, 0
      %p163 = por %p161, %p162
      %s164 = ssub.s32 %s15, %s22
      %p165 = scmp.eq.s32.totalorder %s164, 0
      %s167 = sadd.s32 %s166, 1
      %s168 = scalar_select %p165, %s166, %s167
      %p171 = pneg %p165
      %p172 = scmp.eq.s32.totalorder %s15, 1
      %p173 = por %p171, %p172
      %p174 = scmp.ne.s32.totalorder %s166, %s169
      %p175 = scmp.eq.s32.totalorder %s15, 0
      %p176 = por %p174, %p175
      %p177 = scmp.ne.s32.totalorder %s166, %s169
      %p178 = scmp.eq.s32.totalorder %s20, 1
      %p179 = por %p177, %p178
      %p180 = scmp.ne.s32.totalorder %s169, %s170
      %p181 = scmp.eq.s32.totalorder %s20, 0
      %p182 = por %p180, %p181
      %p183 = scmp.ne.s32.totalorder %s169, %s170
      %p184 = scmp.eq.s32.totalorder %s21, 1
      %p185 = por %p183, %p184
      %p187 = scmp.ne.s32.totalorder %s170, %s186
      %p188 = scmp.eq.s32.totalorder %s21, 0
      %p189 = por %p187, %p188
      %p190 = scmp.le.s32.totalorder 1, %s15
      %p191 = scmp.lt.s32.totalorder %s15, 3
      %p192 = pnand %p190, %p191
      %p193 = pneg %p192
      // Predicated region
      $region9: #{tpu_custom_call.1} parent=5 // pred_check
        _
      $region10: #{tpu_custom_call.1} parent=5 // pred_check_branch
        %195 = sbr.rel (%p192) target = $region12
      $region11: #{tpu_custom_call.1} parent=5 // pred_region
        %s196 = ssub.s32 %s15, 1
        // Predicated region
        $region13: #{tpu_custom_call.1} parent=11 // pred_check
          %p197 = pneg %p114
        $region14: #{tpu_custom_call.1} parent=11 // pred_check_branch
          %199 = sbr.rel (%p197) target = $region16
        $region15: #{tpu_custom_call.1} parent=11 // pred_region
          _
        $region16: #{tpu_custom_call.1} parent=11 // pred_fallthru
          _
        // Predicated region
        $region17: #{tpu_custom_call.1} parent=11 // pred_check
          %p200 = pneg %p135
        $region18: #{tpu_custom_call.1} parent=11 // pred_check_branch
          %202 = sbr.rel (%p200) target = $region20
        $region19: #{tpu_custom_call.1} parent=11 // pred_region
          _
        $region20: #{tpu_custom_call.1} parent=11 // pred_fallthru
          _
        // Predicated region
        $region21: #{tpu_custom_call.1} parent=11 // pred_check
          %p203 = pneg %p156
        $region22: #{tpu_custom_call.1} parent=11 // pred_check_branch
          %205 = sbr.rel (%p203) target = $region24
        $region23: #{tpu_custom_call.1} parent=11 // pred_region
          _
        $region24: #{tpu_custom_call.1} parent=11 // pred_fallthru
          _
      $region12: #{tpu_custom_call.1} parent=5 // pred_fallthru
        _
      %p206 = scmp.lt.s32.totalorder %s15, 2
      // Predicated region
      $region25: #{tpu_custom_call.1} parent=5 // pred_check
        %p207 = pneg %p206
      $region26: #{tpu_custom_call.1} parent=5 // pred_check_branch
        %209 = sbr.rel (%p207) target = $region28
      $region27: #{tpu_custom_call.1} parent=5 // pred_region
        // Predicated region
        $region29: #{tpu_custom_call.1} parent=27 // pred_check
          %p210 = pneg %p35
        $region30: #{tpu_custom_call.1} parent=27 // pred_check_branch
          %212 = sbr.rel (%p210) target = $region32
        $region31: #{tpu_custom_call.1} parent=27 // pred_region
          %p213 = scmp.lt.s32.totalorder %s15, 1
          %s214 = scalar_select %p213, %s15, 1
          %s215 = smul.addr %s214, 2
          %s216 = smul.addr %s215, 8
          %s217 = scalar_lea.vmem %s0, %s216
        $region32: #{tpu_custom_call.1} parent=27 // pred_fallthru
          _
        // Predicated region
        $region33: #{tpu_custom_call.1} parent=27 // pred_check
          %p218 = pneg %p61
        $region34: #{tpu_custom_call.1} parent=27 // pred_check_branch
          %220 = sbr.rel (%p218) target = $region36
        $region35: #{tpu_custom_call.1} parent=27 // pred_region
          %p221 = scmp.lt.s32.totalorder %s15, 1
          %s222 = scalar_select %p221, %s15, 1
          %s223 = smul.addr %s222, 2
          %s224 = smul.addr %s223, 8
          %s225 = scalar_lea.vmem %s1, %s224
        $region36: #{tpu_custom_call.1} parent=27 // pred_fallthru
          _
        // Predicated region
        $region37: #{tpu_custom_call.1} parent=27 // pred_check
          %p226 = pneg %p87
        $region38: #{tpu_custom_call.1} parent=27 // pred_check_branch
          %228 = sbr.rel (%p226) target = $region40
        $region39: #{tpu_custom_call.1} parent=27 // pred_region
          %p229 = scmp.lt.s32.totalorder %s15, 1
          %s230 = scalar_select %p229, %s15, 1
          %s231 = smul.addr %s230, 2
          %s232 = smul.addr %s231, 8
          %s233 = scalar_lea.vmem %s2, %s232
        $region40: #{tpu_custom_call.1} parent=27 // pred_fallthru
          _
      $region28: #{tpu_custom_call.1} parent=5 // pred_fallthru
        _
      %p234 = scmp.le.s32.totalorder 1, %s15
      %p235 = scmp.lt.s32.totalorder %s15, 3
      %p236 = pnand %p234, %p235
      %p237 = pneg %p236
      // Predicated region
      $region41: #{tpu_custom_call.1} parent=5 // pred_check
        _
      $region42: #{tpu_custom_call.1} parent=5 // pred_check_branch
        %239 = sbr.rel (%p236) target = $region44
      $region43: #{tpu_custom_call.1} parent=5 // pred_region
        %s240 = ssub.s32 %s15, 1
        %p241 = scmp.lt.s32.totalorder %s20, 1
        %s242 = scalar_select %p241, %s20, 1
        %s243 = smul.addr %s242, 2
        %s244 = smul.addr %s243, 8
        %s245 = scalar_lea.vmem %s0, %s244
        %p246 = pneg %p41
        %p247 = pneg %p38
        %p248 = scmp.lt.s32.totalorder %s20, 1
        %s249 = scalar_select %p248, %s20, 1
        %s250 = smul.addr %s249, 2
        %s251 = smul.addr %s250, 8
        %s252 = scalar_lea.vmem %s1, %s251
        %p253 = pneg %p67
        %p254 = pneg %p64
        %p255 = scmp.lt.s32.totalorder %s20, 1
        %s256 = scalar_select %p255, %s20, 1
        %s257 = smul.addr %s256, 2
        %s258 = smul.addr %s257, 8
        %s259 = scalar_lea.vmem %s2, %s258
        %p260 = pneg %p93
        %p261 = pneg %p90
        %p262 = pneg %p114
        %p263 = pneg %p111
        %p264 = pneg %p135
        %p265 = pneg %p132
        %p266 = pneg %p156
        %p267 = pneg %p153
        %p268 = pneg %p182
        %p269 = pneg %p179
        %s270 = sand.u32 %s169, 1
        %s271 = scalar_lea.sflag [#allocation3], %s270
        %s272 = sand.u32 %s169, 1
        %s273 = smul.addr %s272, 16
        %s274 = scalar_lea.vmem [#allocation2], %s273
        %p275 = scmp.lt.s32.totalorder %s20, 1
        %s276 = scalar_select %p275, %s20, 1
        %s277 = smul.addr %s276, 2
        %s278 = smul.addr %s277, 8
        %s279 = scalar_lea.vmem %s0, %s278
        %p280 = scmp.lt.s32.totalorder %s20, 1
        %s281 = scalar_select %p280, %s20, 1
        %s282 = smul.addr %s281, 2
        %s283 = smul.addr %s282, 8
        %s284 = scalar_lea.vmem %s1, %s283
        %p285 = scmp.lt.s32.totalorder %s20, 1
        %s286 = scalar_select %p285, %s20, 1
        %s287 = smul.addr %s286, 2
        %s288 = smul.addr %s287, 8
        %s289 = scalar_lea.vmem %s2, %s288
        %v291 = vld [vmem:[%s5] sm:$0xf]
        %v292 = vld [vmem:[%s3] sm:$0xff]
        %v293 = vld [vmem:[%s4] sm:$0xff]
        %v294 = vld [vmem:[%s4 + $0x8] sm:$0xff]
        %v295 = vld [vmem:[%s4 + $0x10] sm:$0xff]
        %v296 = vld [vmem:[%s4 + $0x18] sm:$0xff]
        %v297 = vlaneseq
        %v298 = vand.u32 %v297, 127
        %v299 = vld [vmem:[%s284] sm:$0xff]
        %v300 = vld [vmem:[%s284 + $0x8] sm:$0xff]
        %vm301 = vcmask 64512
        %v303 = vsel %vm301, %v299, 0
        %v306 = vsel %vm301, %v300, 0
        %308 = vmatpush.msra.mxu0 0.0
        %309 = vmatpush.msra.mxu0 0.0
        %310 = vmatpush.msra.mxu0 0.0
        %311 = vmatpush.msra.mxu0 0.0
        %312 = vmatpush.msra.mxu0 0.0
        %313 = vmatpush.msra.mxu0 0.0
        %314 = vmatpush.msra.mxu0 0.0
        %315 = vmatpush.msra.mxu0 0.0
        %316 = vmatpush.msra.mxu0 0.0
        %317 = vmatpush.msra.mxu0 0.0
        %318 = vmatpush.msra.mxu0 0.0
        %319 = vmatpush.msra.mxu0 0.0
        %320 = vmatpush.msra.mxu0 0.0
        %321 = vmatpush.msra.mxu0 0.0
        %322 = vmatpush.msra.mxu0 0.0
        %323 = vmatpush.msra.mxu0 %v292
        %324 = vmatmul.f32.gmra.mxu0 %v303
        %v325 = vpop.f32.mrf.mxu0
        %v326 = vadd.f32 0.0, %v325
        %327 = vmatmul.f32.gmra.mxu0 %v306
        %v328 = vpop.f32.mrf.mxu0
        %v329 = vadd.f32 0.0, %v328
        %330 = vdwg.mxu0
        %v331 = vperm.slane %v291, 0
        %v332 = vmul.f32 %v326, %v331
        %v333 = vmul.f32 %v329, %v331
        %v334 = vperm.slane %v291, 1
        %v335 = vadd.f32 %v332, %v334
        %v336 = vadd.f32 %v333, %v334
        %v337 = vmax.f32 %v335, 0.0
        %v338 = vmax.f32 %v336, 0.0
        %vm339 = vcmask 261120
        %v341 = vsel %vm339, %v337, 0
        %v344 = vsel %vm339, %v338, 0
        %346 = vmatpush.msra.mxu0 0.0
        %347 = vmatpush.msra.mxu0 0.0
        %348 = vmatpush.msra.mxu0 0.0
        %349 = vmatpush.msra.mxu0 0.0
        %350 = vmatpush.msra.mxu0 0.0
        %351 = vmatpush.msra.mxu0 0.0
        %352 = vmatpush.msra.mxu0 0.0
        %353 = vmatpush.msra.mxu0 0.0
        %354 = vmatpush.msra.mxu0 0.0
        %355 = vmatpush.msra.mxu0 0.0
        %356 = vmatpush.msra.mxu0 0.0
        %357 = vmatpush.msra.mxu0 0.0
        %358 = vmatpush.msra.mxu0 %v296
        %359 = vmatpush.msra.mxu0 %v295
        %360 = vmatpush.msra.mxu0 %v294
        %361 = vmatpush.msra.mxu0 %v293
        %362 = vmatmul.f32.gmra.mxu0 %v341
        %v363 = vpop.f32.mrf.mxu0
        %v364 = vadd.f32 0.0, %v363
        %365 = vmatmul.f32.gmra.mxu0 %v344
        %v366 = vpop.f32.mrf.mxu0
        %v367 = vadd.f32 0.0, %v366
        %368 = vdwg.mxu0
        %v369 = vperm.slane %v291, 2
        %371 = vrot.lane.b32.xlu0 %v369, 32
        %v372 = vpop.permute.xlu0 %371
        %v374 = vmul.f32 %v364, %v372
        %v375 = vmul.f32 %v367, %v372
        %378 = vrot.lane.b32.xlu0 %v364, 96
        %v379 = vpop.permute.xlu0 %378
        %380 = vrot.lane.b32.xlu0 %v367, 96
        %v381 = vpop.permute.xlu0 %380
        %v384 = vsub.f32 %v364, %v379
        %v385 = vsub.f32 %v367, %v381
        %v386 = vmul.f32 %v384, %v369
        %v387 = vmul.f32 %v385, %v369
        %v388 = vperm.slane %v291, 3
        %v389 = vadd.f32 %v386, %v388
        %v390 = vadd.f32 %v387, %v388
        %v391 = vpack.c.bf16 %v375, %v374
        %v392 = vld [vmem:[%s279] sm:$0xff]
        %v393 = vld [vmem:[%s279 + $0x8] sm:$0xff]
        %v394 = vmul.f32 %v392, %v392
        %v395 = vmul.f32 %v393, %v393
        %v397 = vsel %vm301, %v392, 0
        %v400 = vsel %vm301, %v393, 0
        %402 = vmatpush.xpose.msra.mxu0 0.0
        %403 = vmatpush.xpose.msra.mxu0 0.0
        %404 = vmatpush.xpose.msra.mxu0 0.0
        %405 = vmatpush.xpose.msra.mxu0 0.0
        %406 = vmatpush.xpose.msra.mxu0 0.0
        %407 = vmatpush.xpose.msra.mxu0 0.0
        %408 = vmatpush.xpose.msra.mxu0 0.0
        %409 = vmatpush.xpose.msra.mxu0 0.0
        %410 = vmatpush.xpose.msra.mxu0 0.0
        %411 = vmatpush.xpose.msra.mxu0 0.0
        %412 = vmatpush.xpose.msra.mxu0 0.0
        %413 = vmatpush.xpose.msra.mxu0 0.0
        %414 = vmatpush.xpose.msra.mxu0 0.0
        %415 = vmatpush.xpose.msra.mxu0 0.0
        %416 = vmatpush.xpose.msra.mxu0 %v400
        %417 = vmatpush.xpose.msra.mxu0 %v397
        %418 = vmatmul.f32.gmra.mxu0 %v397
        %v419 = vpop.f32.mrf.mxu0
        %v420 = vadd.f32 0.0, %v419
        %421 = vmatmul.f32.gmra.mxu0 %v400
        %v422 = vpop.f32.mrf.mxu0
        %v423 = vadd.f32 0.0, %v422
        %424 = vdwg.mxu0
        %v425 = vsel %vm301, %v394, 0.0
        %426 = vadd.xlane.f32.xlu0 %v425
        %v427 = vpop.xlane.xlu0 %426
        %v428 = vsel %vm301, %v395, 0.0
        %429 = vadd.xlane.f32.xlu0 %v428
        %v430 = vpop.xlane.xlu0 %429
        %v432 = vsel %vm301, 1.0, 0
        %v435 = vsel %vm301, %v394, 0
        %v438 = vsel %vm301, %v395, 0
        %440 = vmatpush.xpose.msra.mxu0 0.0
        %441 = vmatpush.xpose.msra.mxu0 0.0
        %442 = vmatpush.xpose.msra.mxu0 0.0
        %443 = vmatpush.xpose.msra.mxu0 0.0
        %444 = vmatpush.xpose.msra.mxu0 0.0
        %445 = vmatpush.xpose.msra.mxu0 0.0
        %446 = vmatpush.xpose.msra.mxu0 0.0
        %447 = vmatpush.xpose.msra.mxu0 0.0
        %448 = vmatpush.xpose.msra.mxu0 0.0
        %449 = vmatpush.xpose.msra.mxu0 0.0
        %450 = vmatpush.xpose.msra.mxu0 0.0
        %451 = vmatpush.xpose.msra.mxu0 0.0
        %452 = vmatpush.xpose.msra.mxu0 0.0
        %453 = vmatpush.xpose.msra.mxu0 0.0
        %454 = vmatpush.xpose.msra.mxu0 %v438
        %455 = vmatpush.xpose.msra.mxu0 %v435
        %456 = vmatmul.f32.gmra.mxu0 %v432
        %v457 = vpop.f32.mrf.mxu0
        %v458 = vadd.f32 0.0, %v457
        %459 = vdwg.mxu0
        %v460 = vperm.slane %v458, 0
        %v461 = vadd.f32 %v427, %v460
        %v462 = vadd.f32 %v430, %v460
        %v463 = vmul.f32 %v420, 2.0
        %v464 = vmul.f32 %v423, 2.0
        %v465 = vsub.f32 %v461, %v463
        %v466 = vsub.f32 %v462, %v464
        %v467 = vmax.f32 %v465, 0.0
        %v468 = vmax.f32 %v466, 0.0
        %v471 = vand.u32 %v467, 4294967280
        %v472 = vand.u32 %v468, 4294967280
        %v473 = vor.u32 %v471, %v298
        %v474 = vor.u32 %v472, %v298
        %vm475 = vcmask 130048
        %v476 = vsel %vm475, %v473, 2147483647
        %v477 = vand.u32 %v476, 65535
        %v478 = vshra.s32 %v476, 16
        %v479 = vcvt.s32.f32 %v477
        %v480 = vcvt.s32.f32 %v478
        %481 = vmin.xlane.f32.xlu0 %v480
        %v482 = vpop.xlane.xlu0 %481
        %vm483 = vcmp.eq.f32.partialorder %v480, %v482
        %v484 = vsel %vm483, %v479, inf
        %485 = vmin.xlane.f32.xlu0 %v484
        %v486 = vpop.xlane.xlu0 %485
        %v487 = vcvt.f32.s32 %v486
        %v488 = vcvt.f32.s32 %v482
        %v489 = vshll.u32 %v488, 16
        %v490 = vadd.s32 %v489, %v487
        %v491 = vsel %vm475, %v474, 2147483647
        %v492 = vand.u32 %v491, 65535
        %v493 = vshra.s32 %v491, 16
        %v494 = vcvt.s32.f32 %v492
        %v495 = vcvt.s32.f32 %v493
        %496 = vmin.xlane.f32.xlu0 %v495
        %v497 = vpop.xlane.xlu0 %496
        %vm498 = vcmp.eq.f32.partialorder %v495, %v497
        %v499 = vsel %vm498, %v494, inf
        %500 = vmin.xlane.f32.xlu0 %v499
        %v501 = vpop.xlane.xlu0 %500
        %v502 = vcvt.f32.s32 %v501
        %v503 = vcvt.f32.s32 %v497
        %v504 = vshll.u32 %v503, 16
        %v505 = vadd.s32 %v504, %v502
        %v506 = vand.u32 %v490, 15
        %v507 = vand.u32 %v505, 15
        %vm508 = vcmp.eq.s32.totalorder %v298, %v506
        %vm509 = vcmp.eq.s32.totalorder %v298, %v507
        %v510 = vsel %vm508, 1, 0
        %v511 = vsel %vm509, 1, 0
        %v512 = vcvt.s32.f32 %v510
        %v513 = vcvt.s32.f32 %v511
        %v514 = vpack.c.bf16 %v513, %v512
        %516 = vrot.lane.b32.xlu0 %v391, 96
        %v517 = vpop.permute.xlu0 %516
        %v520 = vsel %vm475, %v514, 0
        %522 = vmatpush.bf16.msra.mxu0 0
        %523 = vmatpush.bf16.msra.mxu0 0
        %524 = vmatpush.bf16.msra.mxu0 0
        %525 = vmatpush.bf16.msra.mxu0 0
        %526 = vmatpush.bf16.msra.mxu0 0
        %527 = vmatpush.bf16.msra.mxu0 0
        %528 = vmatpush.bf16.msra.mxu0 0
        %529 = vmatpush.bf16.msra.mxu0 %v517
        %530 = vmatmul.bf16.gmra.mxu0 %v520
        %v531 = vpop.f32.mrf.mxu0
        %v532 = vadd.f32 0.0, %v531
        %v533 = vpop.f32.mrf.mxu0
        %v534 = vadd.f32 0.0, %v533
        %535 = vdwg.mxu0
        %v536 = vsel %vm508, 2147483647, %v473
        %v537 = vsel %vm509, 2147483647, %v474
        %v538 = vsel %vm475, %v536, 2147483647
        %v539 = vand.u32 %v538, 65535
        %v540 = vshra.s32 %v538, 16
        %v541 = vcvt.s32.f32 %v539
        %v542 = vcvt.s32.f32 %v540
        %543 = vmin.xlane.f32.xlu0 %v542
        %v544 = vpop.xlane.xlu0 %543
        %vm545 = vcmp.eq.f32.partialorder %v542, %v544
        %v546 = vsel %vm545, %v541, inf
        %547 = vmin.xlane.f32.xlu0 %v546
        %v548 = vpop.xlane.xlu0 %547
        %v549 = vcvt.f32.s32 %v548
        %v550 = vcvt.f32.s32 %v544
        %v551 = vshll.u32 %v550, 16
        %v552 = vadd.s32 %v551, %v549
        %v553 = vsel %vm475, %v537, 2147483647
        %v554 = vand.u32 %v553, 65535
        %v555 = vshra.s32 %v553, 16
        %v556 = vcvt.s32.f32 %v554
        %v557 = vcvt.s32.f32 %v555
        %558 = vmin.xlane.f32.xlu0 %v557
        %v559 = vpop.xlane.xlu0 %558
        %vm560 = vcmp.eq.f32.partialorder %v557, %v559
        %v561 = vsel %vm560, %v556, inf
        %562 = vmin.xlane.f32.xlu0 %v561
        %v563 = vpop.xlane.xlu0 %562
        %v564 = vcvt.f32.s32 %v563
        %v565 = vcvt.f32.s32 %v559
        %v566 = vshll.u32 %v565, 16
        %v567 = vadd.s32 %v566, %v564
        %v568 = vand.u32 %v552, 15
        %v569 = vand.u32 %v567, 15
        %vm570 = vcmp.eq.s32.totalorder %v298, %v568
        %vm571 = vcmp.eq.s32.totalorder %v298, %v569
        %v572 = vsel %vm570, 1, 0
        %v573 = vsel %vm571, 1, 0
        %v574 = vcvt.s32.f32 %v572
        %v575 = vcvt.s32.f32 %v573
        %v576 = vpack.c.bf16 %v575, %v574
        %v578 = vsel %vm475, %v576, 0
        %580 = vmatpush.bf16.msra.mxu0 0
        %581 = vmatpush.bf16.msra.mxu0 0
        %582 = vmatpush.bf16.msra.mxu0 0
        %583 = vmatpush.bf16.msra.mxu0 0
        %584 = vmatpush.bf16.msra.mxu0 0
        %585 = vmatpush.bf16.msra.mxu0 0
        %586 = vmatpush.bf16.msra.mxu0 0
        %587 = vmatpush.bf16.msra.mxu0 %v517
        %588 = vmatmul.bf16.gmra.mxu0 %v578
        %v589 = vpop.f32.mrf.mxu0
        %v590 = vadd.f32 0.0, %v589
        %v591 = vpop.f32.mrf.mxu0
        %v592 = vadd.f32 0.0, %v591
        %593 = vdwg.mxu0
        %v594 = vmax.f32 %v532, %v590
        %v595 = vmax.f32 %v534, %v592
        %v596 = vsel %vm570, 2147483647, %v536
        %v597 = vsel %vm571, 2147483647, %v537
        %v598 = vsel %vm475, %v596, 2147483647
        %v599 = vand.u32 %v598, 65535
        %v600 = vshra.s32 %v598, 16
        %v601 = vcvt.s32.f32 %v599
        %v602 = vcvt.s32.f32 %v600
        %603 = vmin.xlane.f32.xlu0 %v602
        %v604 = vpop.xlane.xlu0 %603
        %vm605 = vcmp.eq.f32.partialorder %v602, %v604
        %v606 = vsel %vm605, %v601, inf
        %607 = vmin.xlane.f32.xlu0 %v606
        %v608 = vpop.xlane.xlu0 %607
        %v609 = vcvt.f32.s32 %v608
        %v610 = vcvt.f32.s32 %v604
        %v611 = vshll.u32 %v610, 16
        %v612 = vadd.s32 %v611, %v609
        %v613 = vsel %vm475, %v597, 2147483647
        %v614 = vand.u32 %v613, 65535
        %v615 = vshra.s32 %v613, 16
        %v616 = vcvt.s32.f32 %v614
        %v617 = vcvt.s32.f32 %v615
        %618 = vmin.xlane.f32.xlu0 %v617
        %v619 = vpop.xlane.xlu0 %618
        %vm620 = vcmp.eq.f32.partialorder %v617, %v619
        %v621 = vsel %vm620, %v616, inf
        %622 = vmin.xlane.f32.xlu0 %v621
        %v623 = vpop.xlane.xlu0 %622
        %v624 = vcvt.f32.s32 %v623
        %v625 = vcvt.f32.s32 %v619
        %v626 = vshll.u32 %v625, 16
        %v627 = vadd.s32 %v626, %v624
        %v628 = vand.u32 %v612, 15
        %v629 = vand.u32 %v627, 15
        %vm630 = vcmp.eq.s32.totalorder %v298, %v628
        %vm631 = vcmp.eq.s32.totalorder %v298, %v629
        %v632 = vsel %vm630, 1, 0
        %v633 = vsel %vm631, 1, 0
        %v634 = vcvt.s32.f32 %v632
        %v635 = vcvt.s32.f32 %v633
        %v636 = vpack.c.bf16 %v635, %v634
        %v638 = vsel %vm475, %v636, 0
        %640 = vmatpush.bf16.msra.mxu0 0
        %641 = vmatpush.bf16.msra.mxu0 0
        %642 = vmatpush.bf16.msra.mxu0 0
        %643 = vmatpush.bf16.msra.mxu0 0
        %644 = vmatpush.bf16.msra.mxu0 0
        %645 = vmatpush.bf16.msra.mxu0 0
        %646 = vmatpush.bf16.msra.mxu0 0
        %647 = vmatpush.bf16.msra.mxu0 %v517
        %648 = vmatmul.bf16.gmra.mxu0 %v638
        %v649 = vpop.f32.mrf.mxu0
        %v650 = vadd.f32 0.0, %v649
        %v651 = vpop.f32.mrf.mxu0
        %v652 = vadd.f32 0.0, %v651
        %653 = vdwg.mxu0
        %v654 = vmax.f32 %v594, %v650
        %v655 = vmax.f32 %v595, %v652
        %v656 = vsel %vm630, 2147483647, %v596
        %v657 = vsel %vm631, 2147483647, %v597
        %v658 = vsel %vm475, %v656, 2147483647
        %v659 = vand.u32 %v658, 65535
        %v660 = vshra.s32 %v658, 16
        %v661 = vcvt.s32.f32 %v659
        %v662 = vcvt.s32.f32 %v660
        %663 = vmin.xlane.f32.xlu0 %v662
        %v664 = vpop.xlane.xlu0 %663
        %vm665 = vcmp.eq.f32.partialorder %v662, %v664
        %v666 = vsel %vm665, %v661, inf
        %667 = vmin.xlane.f32.xlu0 %v666
        %v668 = vpop.xlane.xlu0 %667
        %v669 = vcvt.f32.s32 %v668
        %v670 = vcvt.f32.s32 %v664
        %v671 = vshll.u32 %v670, 16
        %v672 = vadd.s32 %v671, %v669
        %v673 = vsel %vm475, %v657, 2147483647
        %v674 = vand.u32 %v673, 65535
        %v675 = vshra.s32 %v673, 16
        %v676 = vcvt.s32.f32 %v674
        %v677 = vcvt.s32.f32 %v675
        %678 = vmin.xlane.f32.xlu0 %v677
        %v679 = vpop.xlane.xlu0 %678
        %vm680 = vcmp.eq.f32.partialorder %v677, %v679
        %v681 = vsel %vm680, %v676, inf
        %682 = vmin.xlane.f32.xlu0 %v681
        %v683 = vpop.xlane.xlu0 %682
        %v684 = vcvt.f32.s32 %v683
        %v685 = vcvt.f32.s32 %v679
        %v686 = vshll.u32 %v685, 16
        %v687 = vadd.s32 %v686, %v684
        %v688 = vand.u32 %v672, 15
        %v689 = vand.u32 %v687, 15
        %vm690 = vcmp.eq.s32.totalorder %v298, %v688
        %vm691 = vcmp.eq.s32.totalorder %v298, %v689
        %v692 = vsel %vm690, 1, 0
        %v693 = vsel %vm691, 1, 0
        %v694 = vcvt.s32.f32 %v692
        %v695 = vcvt.s32.f32 %v693
        %v696 = vpack.c.bf16 %v695, %v694
        %v698 = vsel %vm475, %v696, 0
        %700 = vmatpush.bf16.msra.mxu0 0
        %701 = vmatpush.bf16.msra.mxu0 0
        %702 = vmatpush.bf16.msra.mxu0 0
        %703 = vmatpush.bf16.msra.mxu0 0
        %704 = vmatpush.bf16.msra.mxu0 0
        %705 = vmatpush.bf16.msra.mxu0 0
        %706 = vmatpush.bf16.msra.mxu0 0
        %707 = vmatpush.bf16.msra.mxu0 %v517
        %708 = vmatmul.bf16.gmra.mxu0 %v698
        %v709 = vpop.f32.mrf.mxu0
        %v710 = vadd.f32 0.0, %v709
        %v711 = vpop.f32.mrf.mxu0
        %v712 = vadd.f32 0.0, %v711
        %713 = vdwg.mxu0
        %v714 = vmax.f32 %v654, %v710
        %v715 = vmax.f32 %v655, %v712
        %v716 = vsel %vm690, 2147483647, %v656
        %v717 = vsel %vm691, 2147483647, %v657
        %v718 = vsel %vm475, %v716, 2147483647
        %v719 = vand.u32 %v718, 65535
        %v720 = vshra.s32 %v718, 16
        %v721 = vcvt.s32.f32 %v719
        %v722 = vcvt.s32.f32 %v720
        %723 = vmin.xlane.f32.xlu0 %v722
        %v724 = vpop.xlane.xlu0 %723
        %vm725 = vcmp.eq.f32.partialorder %v722, %v724
        %v726 = vsel %vm725, %v721, inf
        %727 = vmin.xlane.f32.xlu0 %v726
        %v728 = vpop.xlane.xlu0 %727
        %v729 = vcvt.f32.s32 %v728
        %v730 = vcvt.f32.s32 %v724
        %v731 = vshll.u32 %v730, 16
        %v732 = vadd.s32 %v731, %v729
        %v733 = vsel %vm475, %v717, 2147483647
        %v734 = vand.u32 %v733, 65535
        %v735 = vshra.s32 %v733, 16
        %v736 = vcvt.s32.f32 %v734
        %v737 = vcvt.s32.f32 %v735
        %738 = vmin.xlane.f32.xlu0 %v737
        %v739 = vpop.xlane.xlu0 %738
        %vm740 = vcmp.eq.f32.partialorder %v737, %v739
        %v741 = vsel %vm740, %v736, inf
        %742 = vmin.xlane.f32.xlu0 %v741
        %v743 = vpop.xlane.xlu0 %742
        %v744 = vcvt.f32.s32 %v743
        %v745 = vcvt.f32.s32 %v739
        %v746 = vshll.u32 %v745, 16
        %v747 = vadd.s32 %v746, %v744
        %v748 = vand.u32 %v732, 15
        %v749 = vand.u32 %v747, 15
        %vm750 = vcmp.eq.s32.totalorder %v298, %v748
        %vm751 = vcmp.eq.s32.totalorder %v298, %v749
        %v752 = vsel %vm750, 1, 0
        %v753 = vsel %vm751, 1, 0
        %v754 = vcvt.s32.f32 %v752
        %v755 = vcvt.s32.f32 %v753
        %v756 = vpack.c.bf16 %v755, %v754
        %v758 = vsel %vm475, %v756, 0
        %760 = vmatpush.bf16.msra.mxu0 0
        %761 = vmatpush.bf16.msra.mxu0 0
        %762 = vmatpush.bf16.msra.mxu0 0
        %763 = vmatpush.bf16.msra.mxu0 0
        %764 = vmatpush.bf16.msra.mxu0 0
        %765 = vmatpush.bf16.msra.mxu0 0
        %766 = vmatpush.bf16.msra.mxu0 0
        %767 = vmatpush.bf16.msra.mxu0 %v517
        %768 = vmatmul.bf16.gmra.mxu0 %v758
        %v769 = vpop.f32.mrf.mxu0
        %v770 = vadd.f32 0.0, %v769
        %v771 = vpop.f32.mrf.mxu0
        %v772 = vadd.f32 0.0, %v771
        %773 = vdwg.mxu0
        %v774 = vmax.f32 %v714, %v770
        %v775 = vmax.f32 %v715, %v772
        %v776 = vsel %vm750, 2147483647, %v716
        %v777 = vsel %vm751, 2147483647, %v717
        %v778 = vsel %vm475, %v776, 2147483647
        %v779 = vand.u32 %v778, 65535
        %v780 = vshra.s32 %v778, 16
        %v781 = vcvt.s32.f32 %v779
        %v782 = vcvt.s32.f32 %v780
        %783 = vmin.xlane.f32.xlu0 %v782
        %v784 = vpop.xlane.xlu0 %783
        %vm785 = vcmp.eq.f32.partialorder %v782, %v784
        %v786 = vsel %vm785, %v781, inf
        %787 = vmin.xlane.f32.xlu0 %v786
        %v788 = vpop.xlane.xlu0 %787
        %v789 = vcvt.f32.s32 %v788
        %v790 = vcvt.f32.s32 %v784
        %v791 = vshll.u32 %v790, 16
        %v792 = vadd.s32 %v791, %v789
        %v793 = vsel %vm475, %v777, 2147483647
        %v794 = vand.u32 %v793, 65535
        %v795 = vshra.s32 %v793, 16
        %v796 = vcvt.s32.f32 %v794
        %v797 = vcvt.s32.f32 %v795
        %798 = vmin.xlane.f32.xlu0 %v797
        %v799 = vpop.xlane.xlu0 %798
        %vm800 = vcmp.eq.f32.partialorder %v797, %v799
        %v801 = vsel %vm800, %v796, inf
        %802 = vmin.xlane.f32.xlu0 %v801
        %v803 = vpop.xlane.xlu0 %802
        %v804 = vcvt.f32.s32 %v803
        %v805 = vcvt.f32.s32 %v799
        %v806 = vshll.u32 %v805, 16
        %v807 = vadd.s32 %v806, %v804
        %v808 = vand.u32 %v792, 15
        %v809 = vand.u32 %v807, 15
        %vm810 = vcmp.eq.s32.totalorder %v298, %v808
        %vm811 = vcmp.eq.s32.totalorder %v298, %v809
        %v812 = vsel %vm810, 1, 0
        %v813 = vsel %vm811, 1, 0
        %v814 = vcvt.s32.f32 %v812
        %v815 = vcvt.s32.f32 %v813
        %v816 = vpack.c.bf16 %v815, %v814
        %v818 = vsel %vm475, %v816, 0
        %820 = vmatpush.bf16.msra.mxu0 0
        %821 = vmatpush.bf16.msra.mxu0 0
        %822 = vmatpush.bf16.msra.mxu0 0
        %823 = vmatpush.bf16.msra.mxu0 0
        %824 = vmatpush.bf16.msra.mxu0 0
        %825 = vmatpush.bf16.msra.mxu0 0
        %826 = vmatpush.bf16.msra.mxu0 0
        %827 = vmatpush.bf16.msra.mxu0 %v517
        %828 = vmatmul.bf16.gmra.mxu0 %v818
        %v829 = vpop.f32.mrf.mxu0
        %v830 = vadd.f32 0.0, %v829
        %v831 = vpop.f32.mrf.mxu0
        %v832 = vadd.f32 0.0, %v831
        %833 = vdwg.mxu0
        %v834 = vmax.f32 %v774, %v830
        %v835 = vmax.f32 %v775, %v832
        %v836 = vsel %vm810, 2147483647, %v776
        %v837 = vsel %vm811, 2147483647, %v777
        %v838 = vsel %vm475, %v836, 2147483647
        %v839 = vand.u32 %v838, 65535
        %v840 = vshra.s32 %v838, 16
        %v841 = vcvt.s32.f32 %v839
        %v842 = vcvt.s32.f32 %v840
        %843 = vmin.xlane.f32.xlu0 %v842
        %v844 = vpop.xlane.xlu0 %843
        %vm845 = vcmp.eq.f32.partialorder %v842, %v844
        %v846 = vsel %vm845, %v841, inf
        %847 = vmin.xlane.f32.xlu0 %v846
        %v848 = vpop.xlane.xlu0 %847
        %v849 = vcvt.f32.s32 %v848
        %v850 = vcvt.f32.s32 %v844
        %v851 = vshll.u32 %v850, 16
        %v852 = vadd.s32 %v851, %v849
        %v853 = vsel %vm475, %v837, 2147483647
        %v854 = vand.u32 %v853, 65535
        %v855 = vshra.s32 %v853, 16
        %v856 = vcvt.s32.f32 %v854
        %v857 = vcvt.s32.f32 %v855
        %858 = vmin.xlane.f32.xlu0 %v857
        %v859 = vpop.xlane.xlu0 %858
        %vm860 = vcmp.eq.f32.partialorder %v857, %v859
        %v861 = vsel %vm860, %v856, inf
        %862 = vmin.xlane.f32.xlu0 %v861
        %v863 = vpop.xlane.xlu0 %862
        %v864 = vcvt.f32.s32 %v863
        %v865 = vcvt.f32.s32 %v859
        %v866 = vshll.u32 %v865, 16
        %v867 = vadd.s32 %v866, %v864
        %v868 = vand.u32 %v852, 15
        %v869 = vand.u32 %v867, 15
        %vm870 = vcmp.eq.s32.totalorder %v298, %v868
        %vm871 = vcmp.eq.s32.totalorder %v298, %v869
        %v872 = vsel %vm870, 1, 0
        %v873 = vsel %vm871, 1, 0
        %v874 = vcvt.s32.f32 %v872
        %v875 = vcvt.s32.f32 %v873
        %v876 = vpack.c.bf16 %v875, %v874
        %v878 = vsel %vm475, %v876, 0
        %880 = vmatpush.bf16.msra.mxu0 0
        %881 = vmatpush.bf16.msra.mxu0 0
        %882 = vmatpush.bf16.msra.mxu0 0
        %883 = vmatpush.bf16.msra.mxu0 0
        %884 = vmatpush.bf16.msra.mxu0 0
        %885 = vmatpush.bf16.msra.mxu0 0
        %886 = vmatpush.bf16.msra.mxu0 0
        %887 = vmatpush.bf16.msra.mxu0 %v517
        %888 = vmatmul.bf16.gmra.mxu0 %v878
        %v889 = vpop.f32.mrf.mxu0
        %v890 = vadd.f32 0.0, %v889
        %v891 = vpop.f32.mrf.mxu0
        %v892 = vadd.f32 0.0, %v891
        %893 = vdwg.mxu0
        %v894 = vmax.f32 %v834, %v890
        %v895 = vmax.f32 %v835, %v892
        %v896 = vsel %vm870, 2147483647, %v836
        %v897 = vsel %vm871, 2147483647, %v837
        %v898 = vsel %vm475, %v896, 2147483647
        %v899 = vand.u32 %v898, 65535
        %v900 = vshra.s32 %v898, 16
        %v901 = vcvt.s32.f32 %v899
        %v902 = vcvt.s32.f32 %v900
        %903 = vmin.xlane.f32.xlu0 %v902
        %v904 = vpop.xlane.xlu0 %903
        %vm905 = vcmp.eq.f32.partialorder %v902, %v904
        %v906 = vsel %vm905, %v901, inf
        %907 = vmin.xlane.f32.xlu0 %v906
        %v908 = vpop.xlane.xlu0 %907
        %v909 = vcvt.f32.s32 %v908
        %v910 = vcvt.f32.s32 %v904
        %v911 = vshll.u32 %v910, 16
        %v912 = vadd.s32 %v911, %v909
        %v913 = vsel %vm475, %v897, 2147483647
        %v914 = vand.u32 %v913, 65535
        %v915 = vshra.s32 %v913, 16
        %v916 = vcvt.s32.f32 %v914
        %v917 = vcvt.s32.f32 %v915
        %918 = vmin.xlane.f32.xlu0 %v917
        %v919 = vpop.xlane.xlu0 %918
        %vm920 = vcmp.eq.f32.partialorder %v917, %v919
        %v921 = vsel %vm920, %v916, inf
        %922 = vmin.xlane.f32.xlu0 %v921
        %v923 = vpop.xlane.xlu0 %922
        %v924 = vcvt.f32.s32 %v923
        %v925 = vcvt.f32.s32 %v919
        %v926 = vshll.u32 %v925, 16
        %v927 = vadd.s32 %v926, %v924
        %v928 = vand.u32 %v912, 15
        %v929 = vand.u32 %v927, 15
        %vm930 = vcmp.eq.s32.totalorder %v298, %v928
        %vm931 = vcmp.eq.s32.totalorder %v298, %v929
        %v932 = vsel %vm930, 1, 0
        %v933 = vsel %vm931, 1, 0
        %v934 = vcvt.s32.f32 %v932
        %v935 = vcvt.s32.f32 %v933
        %v936 = vpack.c.bf16 %v935, %v934
        %v938 = vsel %vm475, %v936, 0
        %940 = vmatpush.bf16.msra.mxu0 0
        %941 = vmatpush.bf16.msra.mxu0 0
        %942 = vmatpush.bf16.msra.mxu0 0
        %943 = vmatpush.bf16.msra.mxu0 0
        %944 = vmatpush.bf16.msra.mxu0 0
        %945 = vmatpush.bf16.msra.mxu0 0
        %946 = vmatpush.bf16.msra.mxu0 0
        %947 = vmatpush.bf16.msra.mxu0 %v517
        %948 = vmatmul.bf16.gmra.mxu0 %v938
        %v949 = vpop.f32.mrf.mxu0
        %v950 = vadd.f32 0.0, %v949
        %v951 = vpop.f32.mrf.mxu0
        %v952 = vadd.f32 0.0, %v951
        %953 = vdwg.mxu0
        %v954 = vmax.f32 %v894, %v950
        %v955 = vmax.f32 %v895, %v952
        %v956 = vsel %vm930, 2147483647, %v896
        %v957 = vsel %vm931, 2147483647, %v897
        %v958 = vsel %vm475, %v956, 2147483647
        %v959 = vand.u32 %v958, 65535
        %v960 = vshra.s32 %v958, 16
        %v961 = vcvt.s32.f32 %v959
        %v962 = vcvt.s32.f32 %v960
        %963 = vmin.xlane.f32.xlu0 %v962
        %v964 = vpop.xlane.xlu0 %963
        %vm965 = vcmp.eq.f32.partialorder %v962, %v964
        %v966 = vsel %vm965, %v961, inf
        %967 = vmin.xlane.f32.xlu0 %v966
        %v968 = vpop.xlane.xlu0 %967
        %v969 = vcvt.f32.s32 %v968
        %v970 = vcvt.f32.s32 %v964
        %v971 = vshll.u32 %v970, 16
        %v972 = vadd.s32 %v971, %v969
        %v973 = vsel %vm475, %v957, 2147483647
        %v974 = vand.u32 %v973, 65535
        %v975 = vshra.s32 %v973, 16
        %v976 = vcvt.s32.f32 %v974
        %v977 = vcvt.s32.f32 %v975
        %978 = vmin.xlane.f32.xlu0 %v977
        %v979 = vpop.xlane.xlu0 %978
        %vm980 = vcmp.eq.f32.partialorder %v977, %v979
        %v981 = vsel %vm980, %v976, inf
        %982 = vmin.xlane.f32.xlu0 %v981
        %v983 = vpop.xlane.xlu0 %982
        %v984 = vcvt.f32.s32 %v983
        %v985 = vcvt.f32.s32 %v979
        %v986 = vshll.u32 %v985, 16
        %v987 = vadd.s32 %v986, %v984
        %v988 = vand.u32 %v972, 15
        %v989 = vand.u32 %v987, 15
        %vm990 = vcmp.eq.s32.totalorder %v298, %v988
        %vm991 = vcmp.eq.s32.totalorder %v298, %v989
        %v992 = vsel %vm990, 1, 0
        %v993 = vsel %vm991, 1, 0
        %v994 = vcvt.s32.f32 %v992
        %v995 = vcvt.s32.f32 %v993
        %v996 = vpack.c.bf16 %v995, %v994
        %v998 = vsel %vm475, %v996, 0
        %1000 = vmatpush.bf16.msra.mxu0 0
        %1001 = vmatpush.bf16.msra.mxu0 0
        %1002 = vmatpush.bf16.msra.mxu0 0
        %1003 = vmatpush.bf16.msra.mxu0 0
        %1004 = vmatpush.bf16.msra.mxu0 0
        %1005 = vmatpush.bf16.msra.mxu0 0
        %1006 = vmatpush.bf16.msra.mxu0 0
        %1007 = vmatpush.bf16.msra.mxu0 %v517
        %1008 = vmatmul.bf16.gmra.mxu0 %v998
        %v1009 = vpop.f32.mrf.mxu0
        %v1010 = vadd.f32 0.0, %v1009
        %v1011 = vpop.f32.mrf.mxu0
        %v1012 = vadd.f32 0.0, %v1011
        %1013 = vdwg.mxu0
        %v1014 = vmax.f32 %v954, %v1010
        %v1015 = vmax.f32 %v955, %v1012
        %v1016 = vadd.f32 %v389, %v1014
        %v1017 = vadd.f32 %v390, %v1015
        %v1018 = vmax.f32 %v1016, 0.0
        %v1019 = vmax.f32 %v1017, 0.0
        %v1020 = vmul.f32 %v1018, 0.9
        %v1021 = vmul.f32 %v1019, 0.9
        %v1022 = vld [vmem:[%s289] sm:$0xff]
        %v1023 = vld [vmem:[%s289 + $0x8] sm:$0xff]
        %v1024 = vmul.f32 %v1022, 0.1
        %v1025 = vmul.f32 %v1023, 0.1
        %v1026 = vadd.f32 %v1020, %v1024
        %v1027 = vadd.f32 %v1021, %v1025
        %1028 = vst.msk [vmem:[%s274] sm:$0xff] %vm339, %v1026
        %1029 = vst.msk [vmem:[%s274 + $0x8] sm:$0xff] %vm339, %v1027
        %s1030 = sand.u32 %s169, 1
        %s1031 = scalar_lea.sflag [#allocation3], %s1030
        %s1032 = sand.u32 %s169, 1
        %s1033 = smul.addr %s1032, 16
        %s1034 = scalar_lea.vmem [#allocation2], %s1033
        // Predicated region
        $region45: #{tpu_custom_call.1} parent=43 // pred_check
          %p1035 = pneg %p179
        $region46: #{tpu_custom_call.1} parent=43 // pred_check_branch
          %1037 = sbr.rel (%p1035) target = $region48
        $region47: #{tpu_custom_call.1} parent=43 // pred_region
          %1039 = vsyncadd %s1031, 0
          %s1040 = smul.addr %s20, 2
          %s1041 = smul.addr %s1040, 8
          %s1042 = scalar_lea.hbm %s6, %s1041
          %s1043 = sshll.u32 %s1034, 4
          %s1044 = int_to_ptr.vmem [resolvable:$true] %s1043
          %s1045 = sshll.u32 %s1042, 4
          %s1046 = int_to_ptr.hbm [resolvable:$true] %s1045
          %1051 = dma.vmem_to_hbm [thread:$0]  %s1044, 256, %s1046, %s1031, 128, 128, 8
        $region48: #{tpu_custom_call.1} parent=43 // pred_fallthru
          _
      $region44: #{tpu_custom_call.1} parent=5 // pred_fallthru
        _
      %p1052 = scmp.le.s32.totalorder 2, %s15
      // Predicated region
      $region49: #{tpu_custom_call.1} parent=5 // pred_check
        %p1053 = pneg %p1052
      $region50: #{tpu_custom_call.1} parent=5 // pred_check_branch
        %1055 = sbr.rel (%p1053) target = $region52
      $region51: #{tpu_custom_call.1} parent=5 // pred_region
        %s1056 = ssub.s32 %s15, 2
        // Predicated region
        $region53: #{tpu_custom_call.1} parent=51 // pred_check
          %p1057 = pneg %p185
        $region54: #{tpu_custom_call.1} parent=51 // pred_check_branch
          %1059 = sbr.rel (%p1057) target = $region56
        $region55: #{tpu_custom_call.1} parent=51 // pred_region
          %s1060 = sand.u32 %s170, 1
          %s1061 = scalar_lea.sflag [#allocation3], %s1060
          %s1062 = sand.u32 %s170, 1
          %s1063 = smul.addr %s1062, 16
          %s1064 = scalar_lea.vmem [#allocation2], %s1063
          %1066 = dma.done %s1061, 256
        $region56: #{tpu_custom_call.1} parent=51 // pred_fallthru
          _
      $region52: #{tpu_custom_call.1} parent=5 // pred_fallthru
        _
    $region6: #{tpu_custom_call.1} parent=1 // loop_footer
      %s19 = sadd.s32 1, %s15
    $region7: #{tpu_custom_call.1} parent=1 // loop_footer_branch
      %14 = sbr.rel target = $region3
    $region8: #{tpu_custom_call.1} parent=1 // loop_exit
      _
    %1067 = vsyncpa [#allocation3], 1
    %s1068 = scalar_lea.sflag [#allocation3], 1
    %1069 = vsyncpa %s1068, 1

</llo_original>
